<compile_context>
chip_gen: v6e
topology: v6e:2x2x1
jax: 0.10.0
libtpu: 0.0.40
codegen_flags: <defaults>
</compile_context>

<pallas_src>
import jax
import jax.numpy as jnp
from jax import lax
from jax.experimental import pallas as pl
from jax.experimental.pallas import tpu as pltpu


def _make_unet_down_kernel(normalize: bool):
    def kernel(p_ref, w_ref, o_ref, acc_ref):
        # p_ref: (tk, P) bf16   im2col patches tile (K-tile x all spatial positions)
        # w_ref: (tn, tk) bf16  weight tile (C_out-tile x K-tile)
        # o_ref: (tn, P)        output tile (batch dim squeezed away)
        # acc_ref: (tn, P) f32  accumulator, resident across the K grid axis
        k = pl.program_id(2)

        @pl.when(k == 0)
        def _init():
            acc_ref[...] = jnp.zeros_like(acc_ref)

        acc_ref[...] += jnp.dot(
            w_ref[...], p_ref[...], preferred_element_type=jnp.float32)

        @pl.when(k == pl.num_programs(2) - 1)
        def _finish():
            y = acc_ref[...]                                   # (tn, P) f32
            if normalize:
                # InstanceNorm2d (affine=False, eps=1e-5): per-channel stats over
                # the full spatial extent P, computed in a single pass.
                inv_p = 1.0 / y.shape[-1]
                s1 = jnp.sum(y, axis=-1, keepdims=True)        # (tn, 1)
                s2 = jnp.sum(y * y, axis=-1, keepdims=True)    # (tn, 1)
                mean = s1 * inv_p
                var = jnp.maximum(s2 * inv_p - mean * mean, 0.0)
                y = (y - mean) * lax.rsqrt(var + 1e-5)
            # LeakyReLU(0.2)
            o_ref[...] = jnp.where(y >= 0, y, 0.2 * y).astype(o_ref.dtype)

    return kernel


def _im2col_nkp(x, k, s, pad, dil=1):
    # x: (N, C, H, W) -> patches (N, K, P), K = C*k*k (C-major, then kh, kw), P = Ho*Wo.
    # Lane-dense along P; matches weight.reshape(C_out, C*k*k) ordering.
    N, C, H, W = x.shape
    xp = jnp.pad(x, ((0, 0), (0, 0), (pad, pad), (pad, pad)))
    ke = dil * (k - 1) + 1
    Ho = (H + 2 * pad - ke) // s + 1
    Wo = (W + 2 * pad - ke) // s + 1
    cols = []
    for kh in range(k):
        for kw in range(k):
            h0, w0 = kh * dil, kw * dil
            cols.append(xp[:, :, h0:h0 + s * Ho:s, w0:w0 + s * Wo:s])  # (N,C,Ho,Wo)
    p = jnp.stack(cols, axis=2)                 # (N, C, k*k, Ho, Wo)
    p = p.reshape(N, C * k * k, Ho * Wo)        # (N, K, P)
    return p, Ho, Wo


def _pick_tile(dim, max_tile, align):
    # Largest aligned divisor of `dim` that is <= max_tile; or `dim` itself if small.
    if dim <= max_tile:
        return dim
    t = (max_tile // align) * align
    while t >= align:
        if dim % t == 0:
            return t
        t -= align
    return dim


def _pick_tiles(c_out, k_dim, p_dim, itemsize):
    kind = ""
    try:
        kind = jax.devices()[0].device_kind.lower()
    except Exception:
        pass
    if "v7" in kind:        # 64 MiB physical VMEM -> leave headroom
        tk_max, tn_max, vmem_limit = 2048, 256, 48 * 1024 * 1024
    elif "v6" in kind:      # 128 MiB physical; raise above 32 MiB scoped default
        tk_max, tn_max, vmem_limit = 2048, 256, 96 * 1024 * 1024
    elif "v5" in kind:      # most memory-bound; tighter tiles, 128-wide MXU
        tk_max, tn_max, vmem_limit = 1024, 128, 64 * 1024 * 1024
    else:
        tk_max, tn_max, vmem_limit = 1024, 128, 48 * 1024 * 1024
    # Keep each (double-buffered) patches block (tk x P) within ~8 MiB.
    patch_budget = 8 * 1024 * 1024
    tk_cap = max(128, (patch_budget // max(1, p_dim * itemsize)) // 128 * 128)
    tk = _pick_tile(k_dim, min(tk_max, tk_cap), 128)
    tn = _pick_tile(c_out, tn_max, 8)
    return tn, tk, vmem_limit


def unet_down(x, weight, *, kernel_size=4, stride=2, padding=1, dilation=1,
              normalize=True, compute_dtype=jnp.bfloat16):
    """x: (N, C_in, H, W) NCHW.  weight: (C_out, C_in, kH, kW) (PyTorch layout)."""
    N, C_in, H, W = x.shape
    C_out = weight.shape[0]
    out_dtype = x.dtype

    # bf16 inputs halve HBM traffic; accumulation stays f32 inside the kernel.
    xb = x.astype(compute_dtype)
    patches, Ho, Wo = _im2col_nkp(xb, kernel_size, stride, padding, dilation)  # (N,K,P)
    P = Ho * Wo
    K = C_in * kernel_size * kernel_size
    w_flat = weight.reshape(C_out, K).astype(compute_dtype)                    # (C_out,K)

    itemsize = jnp.dtype(compute_dtype).itemsize
    tn, tk, vmem_limit = _pick_tiles(C_out, K, P, itemsize)
    grid = (N, C_out // tn, K // tk)

    flops = 2 * N * P * K * C_out
    bytes_accessed = (patches.size * itemsize + w_flat.size * itemsize
                      + N * C_out * P * jnp.dtype(out_dtype).itemsize)

    out = pl.pallas_call(
        _make_unet_down_kernel(normalize),
        out_shape=jax.ShapeDtypeStruct((N, C_out, P), out_dtype),
        grid_spec=pltpu.PrefetchScalarGridSpec(
            num_scalar_prefetch=0,
            grid=grid,
            in_specs=[
                # patches: batch dim squeezed, K tiled, full P (lane-dense)
                pl.BlockSpec((None, tk, P), lambda n, j, k: (n, k, 0)),
                # weight: (C_out-tile, K-tile); constant block index on revisits
                pl.BlockSpec((tn, tk), lambda n, j, k: (j, k)),
            ],
            out_specs=pl.BlockSpec((None, tn, P), lambda n, j, k: (n, j, 0)),
            scratch_shapes=[pltpu.VMEM((tn, P), jnp.float32)],
        ),
        compiler_params=pltpu.CompilerParams(
            dimension_semantics=("parallel", "parallel", "arbitrary"),
            vmem_limit_bytes=vmem_limit,
            allow_input_fusion=[True, False],
        ),
        cost_estimate=pl.CostEstimate(
            flops=flops, transcendentals=N * C_out, bytes_accessed=bytes_accessed),
    )(patches, w_flat)

    # (N, C_out, P) -> (N, C_out, Ho, Wo): free reshape, no transpose.
    return out.reshape(N, C_out, Ho, Wo)


def _reference(x, weight, compute_dtype=jnp.bfloat16):
    # Plain-JAX reference with the same bf16-input / f32-accumulate numerics.
    y = lax.conv_general_dilated(
        x.astype(compute_dtype), weight.astype(compute_dtype),
        window_strides=(2, 2), padding=((1, 1), (1, 1)),
        dimension_numbers=("NCHW", "OIHW", "NCHW"),
        preferred_element_type=jnp.float32)
    mean = jnp.mean(y, axis=(2, 3), keepdims=True)
    var = jnp.mean((y - mean) ** 2, axis=(2, 3), keepdims=True)
    yn = (y - mean) * lax.rsqrt(var + 1e-5)
    return jnp.where(yn >= 0, yn, 0.2 * yn)


if __name__ == "__main__":
    # TODO(synk): dropout=0.0 in the default module config, so no dropout layer is instantiated.
    key = jax.random.PRNGKey(0)
    kx, kw = jax.random.split(key)

    N, C_in, H, W = 2, 4, 16, 16
    C_out = 8
    x = jax.random.normal(kx, (N, C_in, H, W), dtype=jnp.float32)
    # PyTorch conv weight layout (C_out, C_in, kH, kW), no bias.
    weight = 0.1 * jax.random.normal(kw, (C_out, C_in, 4, 4), dtype=jnp.float32)

    out = jax.block_until_ready(unet_down(x, weight))
    ref = _reference(x, weight)

    assert out.shape == (N, C_out, H // 2, W // 2), out.shape
    max_err = float(jnp.max(jnp.abs(out - ref)))
    assert jnp.allclose(out, ref, atol=2e-3, rtol=2e-3), max_err
    print("KERNEL_OK")
</pallas_src>

<mosaic_0001>
module attributes {stable_mosaic.version = 11 : i64} {
  func.func @kernel(%arg0: i32, %arg1: i32, %arg2: i32, %arg3: memref<1x64x64xbf16, #tpu.memory_space<vmem>>, %arg4: memref<8x64xbf16, #tpu.memory_space<vmem>>, %arg5: memref<1x8x64xf32, #tpu.memory_space<vmem>>, %arg6: memref<8x64xf32, #tpu.memory_space<vmem>>) attributes {dimension_semantics = [#tpu.dimension_semantics<parallel>, #tpu.dimension_semantics<parallel>, #tpu.dimension_semantics<arbitrary>], iteration_bounds = array<i64: 2, 1, 1>, scalar_prefetch = 0 : i64, scratch_operands = 1 : i64, tpu.core_type = #tpu.core_type<tc>, window_params = [{transform_indices = @transform_0, window_bounds = array<i64: 1, 64, 64>}, {transform_indices = @transform_1, window_bounds = array<i64: 8, 64>}, {transform_indices = @transform_2, window_bounds = array<i64: 1, 8, 64>}]} {
    %c0_i32 = arith.constant 0 : i32
    %0 = arith.cmpi eq, %arg2, %c0_i32 : i32
    %1 = arith.extui %0 : i1 to i32
    %c0_i32_0 = arith.constant 0 : i32
    %2 = arith.cmpi ne, %1, %c0_i32_0 : i32
    scf.if %2 {
      %cst_11 = arith.constant 0.000000e+00 : f32
      %13 = vector.broadcast %cst_11 : f32 to vector<8x64xf32>
      %c0_12 = arith.constant 0 : index
      %c0_13 = arith.constant 0 : index
      %14 = vector.load %arg6[%c0_12, %c0_13] : memref<8x64xf32, #tpu.memory_space<vmem>>, vector<8x64xf32>
      tpu.vector_store %arg6[%c0_12, %c0_13], %13 {strides = array<i32>} : memref<8x64xf32, #tpu.memory_space<vmem>>, vector<8x64xf32>,
    } else {
    }
    %c0 = arith.constant 0 : index
    %c0_1 = arith.constant 0 : index
    %3 = vector.load %arg6[%c0, %c0_1] : memref<8x64xf32, #tpu.memory_space<vmem>>, vector<8x64xf32>
    %c0_2 = arith.constant 0 : index
    %c0_3 = arith.constant 0 : index
    %4 = vector.load %arg4[%c0_2, %c0_3] : memref<8x64xbf16, #tpu.memory_space<vmem>>, vector<8x64xbf16>
    %c0_4 = arith.constant 0 : index
    %c0_5 = arith.constant 0 : index
    %c0_6 = arith.constant 0 : index
    %5 = vector.load %arg3[%c0_4, %c0_5, %c0_6] : memref<1x64x64xbf16, #tpu.memory_space<vmem>>, vector<1x64x64xbf16>
    %6 = vector.shape_cast %5 : vector<1x64x64xbf16> to vector<64x64xbf16>
    %cst = arith.constant dense<0.000000e+00> : vector<8x64xf32>
    %7 = tpu.matmul %4, %6, %cst {dimension_numbers = #tpu.dot_dimension_numbers<[1], [0], [0], [1], [0, 0, 1, 1], [], []>} : vector<8x64xbf16>, vector<64x64xbf16>, vector<8x64xf32> -> vector<8x64xf32>
    %8 = arith.addf %3, %7 : vector<8x64xf32>
    %c0_7 = arith.constant 0 : index
    %c0_8 = arith.constant 0 : index
    %9 = vector.load %arg6[%c0_7, %c0_8] : memref<8x64xf32, #tpu.memory_space<vmem>>, vector<8x64xf32>
    tpu.vector_store %arg6[%c0_7, %c0_8], %8 {strides = array<i32>} : memref<8x64xf32, #tpu.memory_space<vmem>>, vector<8x64xf32>,
    %c0_i32_9 = arith.constant 0 : i32
    %10 = arith.cmpi eq, %arg2, %c0_i32_9 : i32
    %11 = arith.extui %10 : i1 to i32
    %c0_i32_10 = arith.constant 0 : i32
    %12 = arith.cmpi ne, %11, %c0_i32_10 : i32
    scf.if %12 {
      %c0_11 = arith.constant 0 : index
      %c0_12 = arith.constant 0 : index
      %13 = vector.load %arg6[%c0_11, %c0_12] : memref<8x64xf32, #tpu.memory_space<vmem>>, vector<8x64xf32>
      %cst_13 = arith.constant dense<0.000000e+00> : vector<8xf32>
      %14 = vector.multi_reduction <add>, %13, %cst_13 [1] : vector<8x64xf32> to vector<8xf32>
      %15 = vector.shape_cast %14 : vector<8xf32> to vector<8x1xf32>
      %16 = arith.mulf %13, %13 : vector<8x64xf32>
      %cst_14 = arith.constant dense<0.000000e+00> : vector<8xf32>
      %17 = vector.multi_reduction <add>, %16, %cst_14 [1] : vector<8x64xf32> to vector<8xf32>
      %18 = vector.shape_cast %17 : vector<8xf32> to vector<8x1xf32>
      %cst_15 = arith.constant 1.562500e-02 : f32
      %19 = vector.broadcast %cst_15 : f32 to vector<8x1xf32>
      %20 = arith.mulf %15, %19 : vector<8x1xf32>
      %cst_16 = arith.constant 1.562500e-02 : f32
      %21 = vector.broadcast %cst_16 : f32 to vector<8x1xf32>
      %22 = arith.mulf %18, %21 : vector<8x1xf32>
      %23 = arith.mulf %20, %20 : vector<8x1xf32>
      %24 = arith.subf %22, %23 : vector<8x1xf32>
      %cst_17 = arith.constant 0.000000e+00 : f32
      %25 = vector.broadcast %cst_17 : f32 to vector<8x1xf32>
      %26 = arith.maximumf %24, %25 : vector<8x1xf32>
      %27 = vector.broadcast %20 : vector<8x1xf32> to vector<8x64xf32>
      %28 = arith.subf %13, %27 : vector<8x64xf32>
      %cst_18 = arith.constant 9.99999974E-6 : f32
      %29 = vector.broadcast %cst_18 : f32 to vector<8x1xf32>
      %30 = arith.addf %26, %29 : vector<8x1xf32>
      %31 = math.rsqrt %30 : vector<8x1xf32>
      %32 = vector.broadcast %31 : vector<8x1xf32> to vector<8x64xf32>
      %33 = arith.mulf %28, %32 : vector<8x64xf32>
      %cst_19 = arith.constant 0.000000e+00 : f32
      %34 = vector.broadcast %cst_19 : f32 to vector<8x64xf32>
      %35 = arith.cmpf oge, %33, %34 : vector<8x64xf32>
      %cst_20 = arith.constant 2.000000e-01 : f32
      %36 = vector.broadcast %cst_20 : f32 to vector<8x64xf32>
      %37 = arith.mulf %36, %33 : vector<8x64xf32>
      %38 = arith.select %35, %33, %37 : vector<8x64xi1>, vector<8x64xf32>
      %c0_21 = arith.constant 0 : index
      %c0_22 = arith.constant 0 : index
      %c0_23 = arith.constant 0 : index
      %39 = vector.load %arg5[%c0_21, %c0_22, %c0_23] : memref<1x8x64xf32, #tpu.memory_space<vmem>>, vector<1x8x64xf32>
      %40 = vector.shape_cast %39 : vector<1x8x64xf32> to vector<8x64xf32>
      %41 = vector.shape_cast %38 : vector<8x64xf32> to vector<1x8x64xf32>
      tpu.vector_store %arg5[%c0_21, %c0_22, %c0_23], %41 {strides = array<i32>} : memref<1x8x64xf32, #tpu.memory_space<vmem>>, vector<1x8x64xf32>,
    } else {
    }
    return
  }
  func.func @transform_0(%arg0: i32, %arg1: i32, %arg2: i32) -> (i32, i32, i32) {
    %c0_i32 = arith.constant 0 : i32
    %c0_i32_0 = arith.constant 0 : i32
    return %arg0, %arg2, %c0_i32 : i32, i32, i32
  }
  func.func @transform_1(%arg0: i32, %arg1: i32, %arg2: i32) -> (i32, i32) {
    %c0_i32 = arith.constant 0 : i32
    return %arg1, %arg2 : i32, i32
  }
  func.func @transform_2(%arg0: i32, %arg1: i32, %arg2: i32) -> (i32, i32, i32) {
    %c0_i32 = arith.constant 0 : i32
    %c0_i32_0 = arith.constant 0 : i32
    return %arg0, %arg1, %c0_i32 : i32, i32, i32
  }
}

</mosaic_0001>

<llo_original>
// kernel: tpu_custom_call.1
$region0: #{tpu_custom_call.1}
  #allocation0 [shape = 'u32[]', space=smem, size = 0x4, offset = 0x4, fixed_abs, tag = 'smem constant byte address 0x4 - core index']
  #allocation1 [shape = 'u32[144,128]{1,0:T(1,128)}', space=vmem, size = 0x12000, scoped, tag = 'internal scratch']
  #allocation2 [shape = 'f32[8,64]{1,0:T(8,128)}', space=vmem, size = 0x1000, scoped, tag = 'scratch operand']
  %s0 = inlined_call_operand.hbm [shape: bf16[2,64,64], index: 0, kind: input, shape index: {}]
  %s1 = inlined_call_operand.hbm [shape: bf16[8,64], index: 1, kind: input, shape index: {}]
  %s2 = inlined_call_operand.hbm [shape: f32[2,8,64], index: 2, kind: output, shape index: {}]
  %s3 = sld [smem:[#allocation0]]
  $region57: #{tpu_custom_call.1} parent=0
    _
  %s5 = ssub.s32 1, %s3
  %s6 = scalar_select 0, %s5, %s3
  $region1: #{tpu_custom_call.1} parent=0
    #allocation3 [shape = 'u8[32768]{0}', space=vmem, size = 0x8000, scoped, tag = 'input window, operand 0']
    #allocation4 [shape = 's32[2]{0}', space=sflag, size = 0x8, scoped, tag = 'scoped memory for tpu_custom_call.1']
    #allocation5 [shape = 's32[2]{0}', space=sflag, size = 0x8, scoped, tag = 'scoped memory for tpu_custom_call.1']
    #allocation6 [shape = 'u8[2048]{0}', space=vmem, size = 0x800, scoped, tag = 'input window, operand 1, single buffered']
    #allocation7 [shape = 's32[1]{0}', space=sflag, size = 0x4, scoped, tag = 'scoped memory for tpu_custom_call.1']
    #allocation8 [shape = 'u8[8192]{0}', space=vmem, size = 0x2000, scoped, tag = 'output window, operand 0']
    %7 = vsyncpa [#allocation4], 0
    %s8 = scalar_lea.sflag [#allocation4], 1
    %9 = vsyncpa %s8, 0
    %10 = vsyncpa [#allocation7], 0
    %11 = vsyncpa [#allocation5], 0
    %s12 = scalar_lea.sflag [#allocation5], 1
    %13 = vsyncpa %s12, 0
    loop: start=0, step=1, limit=4
    $region2: #{tpu_custom_call.1} parent=1 // loop_pre_header
      _
    $region3: #{tpu_custom_call.1} parent=1 // loop_header
      %s15 = sphi 0, %s19
      %p16 = scmp.ge.s32.totalorder %s15, 4
      %s22 = sphi 0, %s41
      %s23 = sphi 0, %s37
      %s24 = sphi 0, %s33
      %s25 = sphi 0, %s22
      %s26 = sphi 0, %s23
      %s27 = sphi 0, %s24
      %s28 = sphi 0, %s25
      %s29 = sphi 0, %s26
      %s30 = sphi 0, %s27
      %s46 = sphi 0, %s48
      %s49 = sphi 0, %s46
      %s50 = sphi 0, %s49
      %s66 = sphi 0, %s50
      %s74 = sphi 0, %s76
      %s77 = sphi 0, %s74
      %s78 = sphi 0, %s77
      %s94 = sphi 0, %s78
      %s102 = sphi 0, %s104
      %s105 = sphi 0, %s102
      %s106 = sphi 0, %s105
      %s122 = sphi 0, %s106
    $region4: #{tpu_custom_call.1} parent=1 // loop_header_branch
      %18 = sbr.rel (%p16) target = $region8
    $region5: #{tpu_custom_call.1} parent=1 // loop_body
      %s20 = ssub.s32 %s15, 1
      %s21 = ssub.s32 %s15, 2
      %s31 = sadd.s32 1, %s24
      %p32 = scmp.ge.s32.totalorder %s31, 1
      %s33 = scalar_select %p32, 0, %s31
      %s34 = sadd.s32 1, %s23
      %s35 = scalar_select %p32, %s34, %s23
      %p36 = scmp.ge.s32.totalorder %s35, 1
      %s37 = scalar_select %p36, 0, %s35
      %s38 = sadd.s32 1, %s22
      %s39 = scalar_select %p36, %s38, %s22
      %p40 = scmp.ge.s32.totalorder %s39, 2
      %s41 = scalar_select %p40, 0, %s39
      %s42 = ssub.s32 %s22, %s41
      %s43 = ssub.s32 %s24, %s33
      %s44 = sor.u32 %s42, %s43
      %p45 = scmp.eq.s32.totalorder %s44, 0
      %s47 = sadd.s32 %s46, 1
      %s48 = scalar_select %p45, %s46, %s47
      %p51 = pneg %p45
      %p52 = scmp.eq.s32.totalorder %s15, 1
      %p53 = por %p51, %p52
      %p54 = scmp.ne.s32.totalorder %s46, %s49
      %p55 = scmp.eq.s32.totalorder %s15, 0
      %p56 = por %p54, %p55
      %p57 = scmp.ne.s32.totalorder %s46, %s49
      %p58 = scmp.eq.s32.totalorder %s20, 1
      %p59 = por %p57, %p58
      %p60 = scmp.ne.s32.totalorder %s49, %s50
      %p61 = scmp.eq.s32.totalorder %s20, 0
      %p62 = por %p60, %p61
      %p63 = scmp.ne.s32.totalorder %s49, %s50
      %p64 = scmp.eq.s32.totalorder %s21, 1
      %p65 = por %p63, %p64
      %p67 = scmp.ne.s32.totalorder %s50, %s66
      %p68 = scmp.eq.s32.totalorder %s21, 0
      %p69 = por %p67, %p68
      %s70 = ssub.s32 %s23, %s37
      %s71 = ssub.s32 %s24, %s33
      %s72 = sor.u32 %s70, %s71
      %p73 = scmp.eq.s32.totalorder %s72, 0
      %s75 = sadd.s32 %s74, 1
      %s76 = scalar_select %p73, %s74, %s75
      %p79 = pneg %p73
      %p80 = scmp.eq.s32.totalorder %s15, 1
      %p81 = por %p79, %p80
      %p82 = scmp.ne.s32.totalorder %s74, %s77
      %p83 = scmp.eq.s32.totalorder %s15, 0
      %p84 = por %p82, %p83
      %p85 = scmp.ne.s32.totalorder %s74, %s77
      %p86 = scmp.eq.s32.totalorder %s20, 1
      %p87 = por %p85, %p86
      %p88 = scmp.ne.s32.totalorder %s77, %s78
      %p89 = scmp.eq.s32.totalorder %s20, 0
      %p90 = por %p88, %p89
      %p91 = scmp.ne.s32.totalorder %s77, %s78
      %p92 = scmp.eq.s32.totalorder %s21, 1
      %p93 = por %p91, %p92
      %p95 = scmp.ne.s32.totalorder %s78, %s94
      %p96 = scmp.eq.s32.totalorder %s21, 0
      %p97 = por %p95, %p96
      %s98 = ssub.s32 %s22, %s41
      %s99 = ssub.s32 %s23, %s37
      %s100 = sor.u32 %s98, %s99
      %p101 = scmp.eq.s32.totalorder %s100, 0
      %s103 = sadd.s32 %s102, 1
      %s104 = scalar_select %p101, %s102, %s103
      %p107 = pneg %p101
      %p108 = scmp.eq.s32.totalorder %s15, 1
      %p109 = por %p107, %p108
      %p110 = scmp.ne.s32.totalorder %s102, %s105
      %p111 = scmp.eq.s32.totalorder %s15, 0
      %p112 = por %p110, %p111
      %p113 = scmp.ne.s32.totalorder %s102, %s105
      %p114 = scmp.eq.s32.totalorder %s20, 1
      %p115 = por %p113, %p114
      %p116 = scmp.ne.s32.totalorder %s105, %s106
      %p117 = scmp.eq.s32.totalorder %s20, 0
      %p118 = por %p116, %p117
      %p119 = scmp.ne.s32.totalorder %s105, %s106
      %p120 = scmp.eq.s32.totalorder %s21, 1
      %p121 = por %p119, %p120
      %p123 = scmp.ne.s32.totalorder %s106, %s122
      %p124 = scmp.eq.s32.totalorder %s21, 0
      %p125 = por %p123, %p124
      %p126 = scmp.le.s32.totalorder 1, %s15
      %p127 = scmp.lt.s32.totalorder %s15, 3
      %p128 = pnand %p126, %p127
      %p129 = pneg %p128
      // Predicated region
      $region9: #{tpu_custom_call.1} parent=5 // pred_check
        _
      $region10: #{tpu_custom_call.1} parent=5 // pred_check_branch
        %131 = sbr.rel (%p128) target = $region12
      $region11: #{tpu_custom_call.1} parent=5 // pred_region
        %s132 = ssub.s32 %s15, 1
        // Predicated region
        $region13: #{tpu_custom_call.1} parent=11 // pred_check
          %p133 = pneg %p90
        $region14: #{tpu_custom_call.1} parent=11 // pred_check_branch
          %135 = sbr.rel (%p133) target = $region16
        $region15: #{tpu_custom_call.1} parent=11 // pred_region
          %s137 = ssub.s32 64, 64
          %138 = vsyncadd [#allocation7], %s137
          %s139 = sadd.s32 %s27, %s26
          %s140 = smul.addr %s139, 64
          %s141 = scalar_lea.hbm %s1, %s140
          %s143 = sshll.u32 [#allocation6], 4
          %s144 = int_to_ptr.vmem [resolvable:$true] %s143
          %146 = dma.hbm_to_vmem [thread:$0]  %s141, 64, %s144, [#allocation7]
        $region16: #{tpu_custom_call.1} parent=11 // pred_fallthru
          _
      $region12: #{tpu_custom_call.1} parent=5 // pred_fallthru
        _
      %p147 = scmp.lt.s32.totalorder %s15, 2
      // Predicated region
      $region17: #{tpu_custom_call.1} parent=5 // pred_check
        %p148 = pneg %p147
      $region18: #{tpu_custom_call.1} parent=5 // pred_check_branch
        %150 = sbr.rel (%p148) target = $region20
      $region19: #{tpu_custom_call.1} parent=5 // pred_region
        // Predicated region
        $region21: #{tpu_custom_call.1} parent=19 // pred_check
          %p151 = pneg %p56
        $region22: #{tpu_custom_call.1} parent=19 // pred_check_branch
          %153 = sbr.rel (%p151) target = $region24
        $region23: #{tpu_custom_call.1} parent=19 // pred_region
          %s154 = sand.u32 %s46, 1
          %s155 = scalar_lea.sflag [#allocation4], %s154
          %s156 = sand.u32 %s46, 1
          %s157 = smul.addr %s156, 32
          %s158 = scalar_lea.vmem [#allocation3], %s157
          %s159 = smul.u32 8, %s24
          %s161 = ssub.s32 512, 512
          %162 = vsyncadd %s155, %s161
          %s163 = smul.addr %s22, 8
          %s164 = sadd.s32 %s159, %s163
          %s165 = smul.addr %s164, 64
          %s166 = scalar_lea.hbm %s0, %s165
          %s167 = sshll.u32 %s158, 4
          %s168 = int_to_ptr.vmem [resolvable:$true] %s167
          %173 = dma.hbm_to_vmem [thread:$0]  %s166, 512, %s168, %s155, 64, 64, 4
        $region24: #{tpu_custom_call.1} parent=19 // pred_fallthru
          _
      $region20: #{tpu_custom_call.1} parent=5 // pred_fallthru
        _
      %p174 = scmp.le.s32.totalorder 1, %s15
      %p175 = scmp.lt.s32.totalorder %s15, 3
      %p176 = pnand %p174, %p175
      %p177 = pneg %p176
      // Predicated region
      $region25: #{tpu_custom_call.1} parent=5 // pred_check
        _
      $region26: #{tpu_custom_call.1} parent=5 // pred_check_branch
        %179 = sbr.rel (%p176) target = $region28
      $region27: #{tpu_custom_call.1} parent=5 // pred_region
        %s180 = ssub.s32 %s15, 1
        %s181 = sand.u32 %s49, 1
        %s182 = scalar_lea.sflag [#allocation4], %s181
        %s183 = sand.u32 %s49, 1
        %s184 = smul.addr %s183, 32
        %s185 = scalar_lea.vmem [#allocation3], %s184
        // Predicated region
        $region29: #{tpu_custom_call.1} parent=27 // pred_check
          %p186 = pneg %p62
        $region30: #{tpu_custom_call.1} parent=27 // pred_check_branch
          %188 = sbr.rel (%p186) target = $region32
        $region31: #{tpu_custom_call.1} parent=27 // pred_region
          %189 = dma.done %s182, 512
        $region32: #{tpu_custom_call.1} parent=27 // pred_fallthru
          _
        // Predicated region
        $region33: #{tpu_custom_call.1} parent=27 // pred_check
          %p190 = pneg %p90
        $region34: #{tpu_custom_call.1} parent=27 // pred_check_branch
          %192 = sbr.rel (%p190) target = $region36
        $region35: #{tpu_custom_call.1} parent=27 // pred_region
          %193 = dma.done [#allocation7], 64
        $region36: #{tpu_custom_call.1} parent=27 // pred_fallthru
          _
        %s194 = sand.u32 %s49, 1
        %s195 = scalar_lea.sflag [#allocation4], %s194
        %s196 = sand.u32 %s49, 1
        %s197 = smul.addr %s196, 32
        %s198 = scalar_lea.vmem [#allocation3], %s197
        %p199 = pneg %p62
        %p200 = pneg %p59
        %p201 = pneg %p90
        %p202 = pneg %p87
        %p203 = pneg %p118
        %p204 = pneg %p115
        %s205 = sand.u32 %s105, 1
        %s206 = scalar_lea.sflag [#allocation5], %s205
        %s207 = sand.u32 %s105, 1
        %s208 = smul.addr %s207, 8
        %s209 = scalar_lea.vmem [#allocation8], %s208
        %s210 = smul.u32 8, %s27
        %p212 = scmp.eq.s32.totalorder %s27, 0
        // Predicated region
        $region37: #{tpu_custom_call.1} parent=27 // pred_check
          %p213 = pneg %p212
        $region38: #{tpu_custom_call.1} parent=27 // pred_check_branch
          %215 = sbr.rel (%p213) target = $region40
        $region39: #{tpu_custom_call.1} parent=27 // pred_region
          %vm216 = vcmask 523264
          %217 = vst.msk [vmem:[#allocation2] sm:$0xff] %vm216, 0.0
        $region40: #{tpu_custom_call.1} parent=27 // pred_fallthru
          _
        %v218 = vld [vmem:[#allocation2] sm:$0xff]
        %v219 = vld [vmem:[#allocation6] sm:$0xf]
        %v220 = vld [vmem:[%s185] sm:$0xf]
        %v221 = vld [vmem:[%s185 + $0x4] sm:$0xf]
        %v222 = vld [vmem:[%s185 + $0x8] sm:$0xf]
        %v223 = vld [vmem:[%s185 + $0xc] sm:$0xf]
        %v224 = vld [vmem:[%s185 + $0x10] sm:$0xf]
        %v225 = vld [vmem:[%s185 + $0x14] sm:$0xf]
        %v226 = vld [vmem:[%s185 + $0x18] sm:$0xf]
        %v227 = vld [vmem:[%s185 + $0x1c] sm:$0xf]
        %v236 = vunpack.c.l.b16 %v220
        %v237 = vunpack.c.l.b16 %v221
        %v238 = vunpack.c.l.b16 %v222
        %v239 = vunpack.c.l.b16 %v223
        %v240 = vunpack.c.l.b16 %v224
        %v241 = vunpack.c.l.b16 %v225
        %v242 = vunpack.c.l.b16 %v226
        %v243 = vunpack.c.l.b16 %v227
        %v244 = vpack.c.b16 %v237, %v236
        %v245 = vpack.c.b16 %v239, %v238
        %v246 = vpack.c.b16 %v241, %v240
        %v247 = vpack.c.b16 %v243, %v242
        %vm252 = vcmask 523264
        %v254 = vsel %vm252, %v219, 0
        %256 = vmatprep.subr.bf16.mxu0 0
        %257 = vmatpush1.bf16.msra.mxu0 0
        %258 = vmatprep.subr.bf16.mxu0 0
        %259 = vmatpush1.bf16.msra.mxu0 0
        %260 = vmatprep.subr.bf16.mxu0 0
        %261 = vmatpush1.bf16.msra.mxu0 0
        %262 = vmatprep.subr.bf16.mxu0 0
        %263 = vmatpush1.bf16.msra.mxu0 0
        %264 = vmatprep.subr.bf16.mxu0 0
        %265 = vmatpush1.bf16.msra.mxu0 %v247
        %266 = vmatprep.subr.bf16.mxu0 0
        %267 = vmatpush1.bf16.msra.mxu0 %v246
        %268 = vmatprep.subr.bf16.mxu0 0
        %269 = vmatpush1.bf16.msra.mxu0 %v245
        %270 = vmatprep.subr.bf16.mxu0 0
        %271 = vmatpush1.bf16.msra.mxu0 %v244
        %272 = vmatprep.subr.bf16.mxu0 0
        %273 = vmatpush2.bf16.msra.mxu0 0
        %274 = vmatprep.subr.bf16.mxu0 0
        %275 = vmatpush2.bf16.msra.mxu0 0
        %276 = vmatprep.subr.bf16.mxu0 0
        %277 = vmatpush2.bf16.msra.mxu0 0
        %278 = vmatprep.subr.bf16.mxu0 0
        %279 = vmatpush2.bf16.msra.mxu0 0
        %280 = vmatprep.subr.bf16.mxu0 0
        %281 = vmatpush2.bf16.msra.mxu0 0
        %282 = vmatprep.subr.bf16.mxu0 0
        %283 = vmatpush2.bf16.msra.mxu0 0
        %284 = vmatprep.subr.bf16.mxu0 0
        %285 = vmatpush2.bf16.msra.mxu0 0
        %286 = vmatprep.subr.bf16.mxu0 0
        %287 = vmatpush2.bf16.msra.mxu0 0
        %288 = vmatprep.mubr.bf16.mxu0 0
        %289 = vmatmul.mubr.bf16.gmra.mxu0 %v254
        %v290 = vpop.f32.mrf.mxu0
        %v291 = vadd.f32 0.0, %v290
        %v292 = vpop.f32.mrf.mxu0
        %v293 = vpop.f32.mrf.mxu0
        %v294 = vpop.f32.mrf.mxu0
        %295 = vdwg.mxu0
        %v296 = vadd.f32 %v218, %v291
        %297 = vst.msk [vmem:[#allocation2] sm:$0xff] %vm252, %v296
        // Predicated region
        $region41: #{tpu_custom_call.1} parent=27 // pred_check
          %p298 = pneg %p212
        $region42: #{tpu_custom_call.1} parent=27 // pred_check_branch
          %300 = sbr.rel (%p298) target = $region44
        $region43: #{tpu_custom_call.1} parent=27 // pred_region
          %v301 = vld [vmem:[#allocation2] sm:$0xff]
          %v302 = vsel %vm252, %v301, 0.0
          %303 = vadd.xlane.f32.xlu0 %v302
          %v304 = vpop.xlane.xlu0 %303
          %v305 = vmul.f32 %v301, %v301
          %v306 = vsel %vm252, %v305, 0.0
          %307 = vadd.xlane.f32.xlu0 %v306
          %v308 = vpop.xlane.xlu0 %307
          %v309 = vmul.f32 %v304, 0.015625
          %v310 = vmul.f32 %v308, 0.015625
          %v311 = vmul.f32 %v309, %v309
          %v312 = vsub.f32 %v310, %v311
          %v313 = vmax.f32 %v312, 0.0
          %v314 = vsub.f32 %v301, %v309
          %v315 = vadd.f32 %v313, 1e-05
          %v316 = vrsqrt.pop %v315
          %v317 = vmul.f32 %v314, %v316
          %vm318 = vcmp.ge.f32.partialorder %v317, 0.0
          %v319 = vmul.f32 %v317, 0.2
          %v320 = vsel %vm318, %v317, %v319
          %321 = vst.msk [vmem:[%s209] sm:$0xff] %vm252, %v320
        $region44: #{tpu_custom_call.1} parent=27 // pred_fallthru
          _
        %s322 = sand.u32 %s105, 1
        %s323 = scalar_lea.sflag [#allocation5], %s322
        %s324 = sand.u32 %s105, 1
        %s325 = smul.addr %s324, 8
        %s326 = scalar_lea.vmem [#allocation8], %s325
        // Predicated region
        $region45: #{tpu_custom_call.1} parent=27 // pred_check
          %p327 = pneg %p115
        $region46: #{tpu_custom_call.1} parent=27 // pred_check_branch
          %329 = sbr.rel (%p327) target = $region48
        $region47: #{tpu_custom_call.1} parent=27 // pred_region
          %s331 = ssub.s32 128, 128
          %332 = vsyncadd %s323, %s331
          %s333 = sadd.s32 %s26, %s25
          %s334 = smul.addr %s333, 128
          %s335 = scalar_lea.hbm %s2, %s334
          %s337 = sshll.u32 %s326, 4
          %s338 = int_to_ptr.vmem [resolvable:$true] %s337
          %340 = dma.vmem_to_hbm [thread:$0]  %s338, 128, %s335, %s323
        $region48: #{tpu_custom_call.1} parent=27 // pred_fallthru
          _
      $region28: #{tpu_custom_call.1} parent=5 // pred_fallthru
        _
      %p341 = scmp.le.s32.totalorder 2, %s15
      // Predicated region
      $region49: #{tpu_custom_call.1} parent=5 // pred_check
        %p342 = pneg %p341
      $region50: #{tpu_custom_call.1} parent=5 // pred_check_branch
        %344 = sbr.rel (%p342) target = $region52
      $region51: #{tpu_custom_call.1} parent=5 // pred_region
        %s345 = ssub.s32 %s15, 2
        // Predicated region
        $region53: #{tpu_custom_call.1} parent=51 // pred_check
          %p346 = pneg %p121
        $region54: #{tpu_custom_call.1} parent=51 // pred_check_branch
          %348 = sbr.rel (%p346) target = $region56
        $region55: #{tpu_custom_call.1} parent=51 // pred_region
          %s349 = sand.u32 %s106, 1
          %s350 = scalar_lea.sflag [#allocation5], %s349
          %s351 = sand.u32 %s106, 1
          %s352 = smul.addr %s351, 8
          %s353 = scalar_lea.vmem [#allocation8], %s352
          %354 = dma.done %s350, 128
        $region56: #{tpu_custom_call.1} parent=51 // pred_fallthru
          _
      $region52: #{tpu_custom_call.1} parent=5 // pred_fallthru
        _
    $region6: #{tpu_custom_call.1} parent=1 // loop_footer
      %s19 = sadd.s32 1, %s15
    $region7: #{tpu_custom_call.1} parent=1 // loop_footer_branch
      %14 = sbr.rel target = $region3
    $region8: #{tpu_custom_call.1} parent=1 // loop_exit
      _
    %355 = vsyncpa [#allocation4], 1
    %s356 = scalar_lea.sflag [#allocation4], 1
    %357 = vsyncpa %s356, 1
    %358 = vsyncpa [#allocation7], 1
    %359 = vsyncpa [#allocation5], 1
    %s360 = scalar_lea.sflag [#allocation5], 1
    %361 = vsyncpa %s360, 1

</llo_original>
